<compile_context>
chip_gen: v6e
topology: v6e:2x2x1
jax: 0.10.0
libtpu: 0.0.40
codegen_flags: <defaults>
</compile_context>

<pallas_src>
import jax
import jax.numpy as jnp
from jax.experimental import pallas as pl
from jax.experimental.pallas import tpu as pltpu


# ------------------------------- helpers -----------------------------------

def pair(t):
    return t if isinstance(t, tuple) else (t, t)


def _round_up(x, m):
    return (x + m - 1) // m * m


# ----------------------------- Pallas kernel -------------------------------

def _patch_embed_kernel(x_ref, w_ref, b_ref, o_ref):
    # x_ref: (tm, K) bf16, w_ref: (K, E) bf16, b_ref: (1, E) f32, o_ref: (tm, E) f32
    acc = jnp.dot(x_ref[...], w_ref[...], preferred_element_type=jnp.float32)
    o_ref[...] = (acc + b_ref[...]).astype(o_ref.dtype)


def _patch_embed_matmul(patches, w, b, *, tm, out_dtype):
    """patches: (M, K) bf16 (M % tm == 0), w: (K, E) bf16, b: (1, E) f32."""
    M, K = patches.shape
    _, E = w.shape
    assert M % tm == 0 and tm % 8 == 0 and E % 128 == 0

    cost = pl.CostEstimate(
        flops=2 * M * K * E,
        transcendentals=0,
        bytes_accessed=(patches.size * patches.dtype.itemsize
                        + w.size * w.dtype.itemsize
                        + b.size * b.dtype.itemsize
                        + M * E * jnp.dtype(out_dtype).itemsize),
    )

    return pl.pallas_call(
        _patch_embed_kernel,
        out_shape=jax.ShapeDtypeStruct((M, E), out_dtype),
        grid_spec=pltpu.PrefetchScalarGridSpec(
            num_scalar_prefetch=0,
            grid=(M // tm,),
            in_specs=[
                pl.BlockSpec((tm, K), lambda i: (i, 0)),   # token tile
                pl.BlockSpec((K, E), lambda i: (0, 0)),    # resident weight
                pl.BlockSpec((1, E), lambda i: (0, 0)),    # resident bias
            ],
            out_specs=pl.BlockSpec((tm, E), lambda i: (i, 0)),
        ),
        compiler_params=pltpu.CompilerParams(
            dimension_semantics=("parallel",),
            vmem_limit_bytes=32 * 1024 * 1024,
        ),
        cost_estimate=cost,
    )(patches, w, b)


# ------------------------------ PatchEmbed ---------------------------------

class PatchEmbed:
    """JAX/Pallas port of the PyTorch PatchEmbed module."""

    # Row-tile size for the projection matmul (multiple of 8; 256 fills the
    # 256-wide MXU on v6e/v7x and is fine on v5e's 128x128 MXU).
    _TM = 256

    def __init__(self, img_size=224, patch_size=16, in_chans=3, embed_dim=768,
                 num_frames=16, tubelet_size=2, key=None, dtype=jnp.float32):
        img_size = pair(img_size)
        patch_size = pair(patch_size)
        self.tubelet_size = int(tubelet_size)
        self.img_size = img_size
        self.patch_size = patch_size
        self.in_chans = in_chans
        self.embed_dim = embed_dim
        self.num_patches = (img_size[1] // patch_size[1]
                            * (img_size[0] // patch_size[0])
                            * (num_frames // self.tubelet_size))

        # Deterministic parameter init (mirrors Conv3d param shapes).
        if key is None:
            key = jax.random.PRNGKey(0)
        kw_key, kb_key = jax.random.split(key)
        kt, ph, pw = self.tubelet_size, patch_size[0], patch_size[1]
        fan_in = in_chans * kt * ph * pw
        bound = 1.0 / (fan_in ** 0.5)
        # Conv3d weight: (E, C, kt, kh, kw); bias: (E,)  (kept for reference)
        self.proj_weight = jax.random.uniform(
            kw_key, (embed_dim, in_chans, kt, ph, pw),
            minval=-bound, maxval=bound, dtype=dtype)
        self.proj_bias = jax.random.uniform(
            kb_key, (embed_dim,), minval=-bound, maxval=bound, dtype=dtype)

        # Pre-reshape / pre-transpose the projection to (K, E_pad) bf16 and
        # bias to (1, E_pad) f32 once at init (E padded to a lane multiple).
        K = fan_in
        self._K = K
        self._E_pad = _round_up(embed_dim, 128)
        w_ke = self.proj_weight.reshape(embed_dim, K).T            # (K, E)
        if self._E_pad != embed_dim:
            w_ke = jnp.pad(w_ke, ((0, 0), (0, self._E_pad - embed_dim)))
            b_pad = jnp.pad(self.proj_bias, (0, self._E_pad - embed_dim))
        else:
            b_pad = self.proj_bias
        self._w_ke_bf16 = w_ke.astype(jnp.bfloat16)                 # (K, E_pad)
        self._b_2d = b_pad.reshape(1, self._E_pad).astype(jnp.float32)

    def _extract_patches(self, x):
        # x: (B, C, T, H, W) -> (B*N, K), K = C*kt*ph*pw in (C, kt, kh, kw)
        # order (matches Conv3d weight flattening).  Cast to bf16 first so the
        # materialized token matrix / transpose traffic is half-size.
        B, C, T, H, W = x.shape
        kt, (ph, pw) = self.tubelet_size, self.patch_size
        Tp, Hp, Wp = T // kt, H // ph, W // pw
        x = x.astype(jnp.bfloat16)
        x = x.reshape(B, C, Tp, kt, Hp, ph, Wp, pw)
        x = jnp.transpose(x, (0, 2, 4, 6, 1, 3, 5, 7))   # (B,T',H',W',C,kt,kh,kw)
        return x.reshape(B * Tp * Hp * Wp, C * kt * ph * pw), (B, Tp * Hp * Wp)

    def __call__(self, x):
        B, C, T, H, W = x.shape
        assert H == self.img_size[0] and W == self.img_size[1], (
            f"Input image size ({H}*{W}) doesn't match model "
            f"({self.img_size[0]}*{self.img_size[1]}).")
        out_dtype = x.dtype

        patches, (B, N) = self._extract_patches(x)        # (M, K) bf16
        M = patches.shape[0]

        # Tile rows; pad M up to a multiple of the tile instead of asserting.
        tm = self._TM if M >= self._TM else _round_up(M, 8)
        M_pad = _round_up(M, tm)
        if M_pad != M:
            patches = jnp.pad(patches, ((0, M_pad - M), (0, 0)))

        out = _patch_embed_matmul(patches, self._w_ke_bf16, self._b_2d,
                                  tm=tm, out_dtype=out_dtype)  # (M_pad, E_pad)
        out = out[:M, :self.embed_dim]
        return out.reshape(B, N, self.embed_dim)           # (B, N, embed_dim)


# ------------------------------- reference ---------------------------------

def _reference(x, module: PatchEmbed):
    # Pure f32 reference of Conv3d(kernel=stride) -> flatten -> transpose.
    B, C, T, H, W = x.shape
    kt, (ph, pw) = module.tubelet_size, module.patch_size
    Tp, Hp, Wp = T // kt, H // ph, W // pw
    xr = x.astype(jnp.float32).reshape(B, C, Tp, kt, Hp, ph, Wp, pw)
    xr = jnp.transpose(xr, (0, 2, 4, 6, 1, 3, 5, 7))
    xr = xr.reshape(B * Tp * Hp * Wp, C * kt * ph * pw)
    w2d = module.proj_weight.reshape(module.embed_dim, -1).T.astype(jnp.float32)
    out = xr @ w2d + module.proj_bias[None, :].astype(jnp.float32)
    return out.reshape(B, Tp * Hp * Wp, module.embed_dim)


# --------------------------------- main -------------------------------------

if __name__ == "__main__":
    key = jax.random.PRNGKey(0)
    xk, pk = jax.random.split(key)

    # Small shapes consistent with the module:
    B, C, T, H, W = 2, 4, 8, 16, 16
    patch, tubelet, embed_dim = 8, 2, 32

    module = PatchEmbed(img_size=H, patch_size=patch, in_chans=C,
                        embed_dim=embed_dim, num_frames=T,
                        tubelet_size=tubelet, key=pk)

    x = jax.random.normal(xk, (B, C, T, H, W), dtype=jnp.float32)

    out = module(x)
    out = jax.block_until_ready(out)

    expected_N = (T // tubelet) * (H // patch) * (W // patch)
    assert out.shape == (B, expected_N, embed_dim), out.shape

    ref = _reference(x, module)
    # bf16 MXU inputs + f32 accumulation -> compare against f32 reference with
    # a bf16-appropriate tolerance.
    max_err = float(jnp.max(jnp.abs(out.astype(jnp.float32) - ref)))
    assert jnp.allclose(out.astype(jnp.float32), ref, atol=3e-2, rtol=3e-2), max_err

    print("KERNEL_OK")
</pallas_src>

<mosaic_0001>
module attributes {stable_mosaic.version = 11 : i64} {
  func.func @_patch_embed_kernel(%arg0: i32, %arg1: memref<32x512xbf16, #tpu.memory_space<vmem>>, %arg2: memref<512x128xbf16, #tpu.memory_space<vmem>>, %arg3: memref<1x128xf32, #tpu.memory_space<vmem>>, %arg4: memref<32x128xf32, #tpu.memory_space<vmem>>) attributes {dimension_semantics = [#tpu.dimension_semantics<parallel>], iteration_bounds = array<i64: 1>, scalar_prefetch = 0 : i64, scratch_operands = 0 : i64, tpu.core_type = #tpu.core_type<tc>, window_params = [{transform_indices = @transform_0, window_bounds = array<i64: 32, 512>}, {pipeline_mode = #tpu.pipeline_mode<synchronous>, transform_indices = @transform_1, window_bounds = array<i64: 512, 128>}, {pipeline_mode = #tpu.pipeline_mode<synchronous>, transform_indices = @transform_2, window_bounds = array<i64: 1, 128>}, {transform_indices = @transform_3, window_bounds = array<i64: 32, 128>}]} {
    %c0 = arith.constant 0 : index
    %c0_0 = arith.constant 0 : index
    %0 = vector.load %arg1[%c0, %c0_0] : memref<32x512xbf16, #tpu.memory_space<vmem>>, vector<32x512xbf16>
    %c0_1 = arith.constant 0 : index
    %c0_2 = arith.constant 0 : index
    %1 = vector.load %arg2[%c0_1, %c0_2] : memref<512x128xbf16, #tpu.memory_space<vmem>>, vector<512x128xbf16>
    %cst = arith.constant dense<0.000000e+00> : vector<32x128xf32>
    %2 = tpu.matmul %0, %1, %cst {dimension_numbers = #tpu.dot_dimension_numbers<[1], [0], [0], [1], [0, 0, 1, 1], [], []>} : vector<32x512xbf16>, vector<512x128xbf16>, vector<32x128xf32> -> vector<32x128xf32>
    %c0_3 = arith.constant 0 : index
    %c0_4 = arith.constant 0 : index
    %3 = vector.load %arg3[%c0_3, %c0_4] : memref<1x128xf32, #tpu.memory_space<vmem>>, vector<1x128xf32>
    %4 = vector.broadcast %3 : vector<1x128xf32> to vector<32x128xf32>
    %5 = arith.addf %2, %4 : vector<32x128xf32>
    %c0_5 = arith.constant 0 : index
    %c0_6 = arith.constant 0 : index
    %6 = vector.load %arg4[%c0_5, %c0_6] : memref<32x128xf32, #tpu.memory_space<vmem>>, vector<32x128xf32>
    tpu.vector_store %arg4[%c0_5, %c0_6], %5 {strides = array<i32>} : memref<32x128xf32, #tpu.memory_space<vmem>>, vector<32x128xf32>,
    return
  }
  func.func @transform_0(%arg0: i32) -> (i32, i32) {
    %c0_i32 = arith.constant 0 : i32
    %c0_i32_0 = arith.constant 0 : i32
    return %arg0, %c0_i32 : i32, i32
  }
  func.func @transform_1(%arg0: i32) -> (i32, i32) {
    %c0_i32 = arith.constant 0 : i32
    %c0_i32_0 = arith.constant 0 : i32
    %c0_i32_1 = arith.constant 0 : i32
    return %c0_i32, %c0_i32_0 : i32, i32
  }
  func.func @transform_2(%arg0: i32) -> (i32, i32) {
    %c0_i32 = arith.constant 0 : i32
    %c0_i32_0 = arith.constant 0 : i32
    %c0_i32_1 = arith.constant 0 : i32
    return %c0_i32, %c0_i32_0 : i32, i32
  }
  func.func @transform_3(%arg0: i32) -> (i32, i32) {
    %c0_i32 = arith.constant 0 : i32
    %c0_i32_0 = arith.constant 0 : i32
    return %arg0, %c0_i32 : i32, i32
  }
}

</mosaic_0001>

<llo_original>
// kernel: tpu_custom_call.1
$region0: #{tpu_custom_call.1}
  #allocation0 [shape = 'u32[]', space=smem, size = 0x4, offset = 0x4, fixed_abs, tag = 'smem constant byte address 0x4 - core index']
  #allocation1 [shape = 'u32[144,128]{1,0:T(1,128)}', space=vmem, size = 0x12000, scoped, tag = 'internal scratch']
  %s0 = inlined_call_operand.hbm [shape: bf16[32,512], index: 0, kind: input, shape index: {}]
  %s1 = inlined_call_operand.hbm [shape: bf16[512,128], index: 1, kind: input, shape index: {}]
  %s2 = inlined_call_operand.vmem [shape: f32[1,128], index: 2, kind: input, shape index: {}]
  %s3 = inlined_call_operand.hbm [shape: f32[32,128], index: 3, kind: output, shape index: {}]
  %s4 = sld [smem:[#allocation0]]
  $region30: #{tpu_custom_call.1} parent=0
    _
  %s6 = ssub.s32 1, %s4
  %s7 = scalar_select 0, %s6, %s4
  $region1: #{tpu_custom_call.1} parent=0
    #allocation2 [shape = 'u8[32768]{0}', space=vmem, size = 0x8000, scoped, tag = 'input window, operand 0, single buffered']
    #allocation3 [shape = 's32[1]{0}', space=sflag, size = 0x4, scoped, tag = 'scoped memory for tpu_custom_call.1']
    #allocation4 [shape = 's32[1]{0}', space=sflag, size = 0x4, scoped, tag = 'scoped memory for tpu_custom_call.1']
    #allocation5 [shape = 'u8[131072]{0}', space=vmem, size = 0x20000, scoped, tag = 'input window, operand 1, single buffered']
    #allocation6 [shape = 's32[1]{0}', space=sflag, size = 0x4, scoped, tag = 'scoped memory for tpu_custom_call.1']
    #allocation7 [shape = 'u8[16384]{0}', space=vmem, size = 0x4000, scoped, tag = 'output window, operand 0, single buffered']
    %8 = vsyncpa [#allocation3], 0
    %9 = vsyncpa [#allocation6], 0
    %10 = vsyncpa [#allocation4], 0
    // Predicated region
    $region2: #{tpu_custom_call.1} parent=1 // pred_check
      _
    $region3: #{tpu_custom_call.1} parent=1 // pred_check_branch
      %12 = sbr.rel (0) target = $region5
    $region4: #{tpu_custom_call.1} parent=1 // pred_region
      %s14 = ssub.s32 1024, 1024
      %15 = vsyncadd [#allocation3], %s14
      %s16 = sshll.u32 [#allocation2], 4
      %s17 = int_to_ptr.vmem [resolvable:$true] %s16
      %22 = dma.hbm_to_vmem [thread:$0]  %s0, 1024, %s17, [#allocation3], 256, 256, 16
    $region5: #{tpu_custom_call.1} parent=1 // pred_fallthru
      _
    // Predicated region
    $region6: #{tpu_custom_call.1} parent=1 // pred_check
      _
    $region7: #{tpu_custom_call.1} parent=1 // pred_check_branch
      %24 = sbr.rel (0) target = $region9
    $region8: #{tpu_custom_call.1} parent=1 // pred_region
      %s26 = ssub.s32 4096, 4096
      %27 = vsyncadd [#allocation6], %s26
      %s28 = sshll.u32 [#allocation5], 4
      %s29 = int_to_ptr.vmem [resolvable:$true] %s28
      %34 = dma.hbm_to_vmem [thread:$0]  %s1, 4096, %s29, [#allocation6], 64, 64, 4
    $region9: #{tpu_custom_call.1} parent=1 // pred_fallthru
      _
    // Predicated region
    $region10: #{tpu_custom_call.1} parent=1 // pred_check
      _
    $region11: #{tpu_custom_call.1} parent=1 // pred_check_branch
      %36 = sbr.rel (0) target = $region13
    $region12: #{tpu_custom_call.1} parent=1 // pred_region
      _
    $region13: #{tpu_custom_call.1} parent=1 // pred_fallthru
      _
    // Predicated region
    $region14: #{tpu_custom_call.1} parent=1 // pred_check
      _
    $region15: #{tpu_custom_call.1} parent=1 // pred_check_branch
      %38 = sbr.rel (0) target = $region17
    $region16: #{tpu_custom_call.1} parent=1 // pred_region
      %39 = dma.done [#allocation3], 1024
    $region17: #{tpu_custom_call.1} parent=1 // pred_fallthru
      _
    // Predicated region
    $region18: #{tpu_custom_call.1} parent=1 // pred_check
      _
    $region19: #{tpu_custom_call.1} parent=1 // pred_check_branch
      %41 = sbr.rel (0) target = $region21
    $region20: #{tpu_custom_call.1} parent=1 // pred_region
      %42 = dma.done [#allocation6], 4096
    $region21: #{tpu_custom_call.1} parent=1 // pred_fallthru
      _
    %v44 = vld [vmem:[#allocation2] sm:$0xff]
    %v45 = vld [vmem:[#allocation2 + $0x8] sm:$0xff]
    %v46 = vld [vmem:[#allocation2 + $0x10] sm:$0xff]
    %v47 = vld [vmem:[#allocation2 + $0x18] sm:$0xff]
    %v48 = vld [vmem:[#allocation2 + $0x20] sm:$0xff]
    %v49 = vld [vmem:[#allocation2 + $0x28] sm:$0xff]
    %v50 = vld [vmem:[#allocation2 + $0x30] sm:$0xff]
    %v51 = vld [vmem:[#allocation2 + $0x38] sm:$0xff]
    %v52 = vld [vmem:[#allocation5] sm:$0xf]
    %v53 = vld [vmem:[#allocation5 + $0x4] sm:$0xf]
    %v54 = vld [vmem:[#allocation5 + $0x8] sm:$0xf]
    %v55 = vld [vmem:[#allocation5 + $0xc] sm:$0xf]
    %v56 = vld [vmem:[#allocation5 + $0x10] sm:$0xf]
    %v57 = vld [vmem:[#allocation5 + $0x14] sm:$0xf]
    %v58 = vld [vmem:[#allocation5 + $0x18] sm:$0xf]
    %v59 = vld [vmem:[#allocation5 + $0x1c] sm:$0xf]
    %v60 = vld [vmem:[#allocation5 + $0x20] sm:$0xf]
    %v61 = vld [vmem:[#allocation5 + $0x24] sm:$0xf]
    %v62 = vld [vmem:[#allocation5 + $0x28] sm:$0xf]
    %v63 = vld [vmem:[#allocation5 + $0x2c] sm:$0xf]
    %v64 = vld [vmem:[#allocation5 + $0x30] sm:$0xf]
    %v65 = vld [vmem:[#allocation5 + $0x34] sm:$0xf]
    %v66 = vld [vmem:[#allocation5 + $0x38] sm:$0xf]
    %v67 = vld [vmem:[#allocation5 + $0x3c] sm:$0xf]
    %v68 = vld [vmem:[#allocation5 + $0x40] sm:$0xf]
    %v69 = vld [vmem:[#allocation5 + $0x44] sm:$0xf]
    %v70 = vld [vmem:[#allocation5 + $0x48] sm:$0xf]
    %v71 = vld [vmem:[#allocation5 + $0x4c] sm:$0xf]
    %v72 = vld [vmem:[#allocation5 + $0x50] sm:$0xf]
    %v73 = vld [vmem:[#allocation5 + $0x54] sm:$0xf]
    %v74 = vld [vmem:[#allocation5 + $0x58] sm:$0xf]
    %v75 = vld [vmem:[#allocation5 + $0x5c] sm:$0xf]
    %v76 = vld [vmem:[#allocation5 + $0x60] sm:$0xf]
    %v77 = vld [vmem:[#allocation5 + $0x64] sm:$0xf]
    %v78 = vld [vmem:[#allocation5 + $0x68] sm:$0xf]
    %v79 = vld [vmem:[#allocation5 + $0x6c] sm:$0xf]
    %v80 = vld [vmem:[#allocation5 + $0x70] sm:$0xf]
    %v81 = vld [vmem:[#allocation5 + $0x74] sm:$0xf]
    %v82 = vld [vmem:[#allocation5 + $0x78] sm:$0xf]
    %v83 = vld [vmem:[#allocation5 + $0x7c] sm:$0xf]
    %v84 = vld [vmem:[#allocation5 + $0x80] sm:$0xf]
    %v85 = vld [vmem:[#allocation5 + $0x84] sm:$0xf]
    %v86 = vld [vmem:[#allocation5 + $0x88] sm:$0xf]
    %v87 = vld [vmem:[#allocation5 + $0x8c] sm:$0xf]
    %v88 = vld [vmem:[#allocation5 + $0x90] sm:$0xf]
    %v89 = vld [vmem:[#allocation5 + $0x94] sm:$0xf]
    %v90 = vld [vmem:[#allocation5 + $0x98] sm:$0xf]
    %v91 = vld [vmem:[#allocation5 + $0x9c] sm:$0xf]
    %v92 = vld [vmem:[#allocation5 + $0xa0] sm:$0xf]
    %v93 = vld [vmem:[#allocation5 + $0xa4] sm:$0xf]
    %v94 = vld [vmem:[#allocation5 + $0xa8] sm:$0xf]
    %v95 = vld [vmem:[#allocation5 + $0xac] sm:$0xf]
    %v96 = vld [vmem:[#allocation5 + $0xb0] sm:$0xf]
    %v97 = vld [vmem:[#allocation5 + $0xb4] sm:$0xf]
    %v98 = vld [vmem:[#allocation5 + $0xb8] sm:$0xf]
    %v99 = vld [vmem:[#allocation5 + $0xbc] sm:$0xf]
    %v100 = vld [vmem:[#allocation5 + $0xc0] sm:$0xf]
    %v101 = vld [vmem:[#allocation5 + $0xc4] sm:$0xf]
    %v102 = vld [vmem:[#allocation5 + $0xc8] sm:$0xf]
    %v103 = vld [vmem:[#allocation5 + $0xcc] sm:$0xf]
    %v104 = vld [vmem:[#allocation5 + $0xd0] sm:$0xf]
    %v105 = vld [vmem:[#allocation5 + $0xd4] sm:$0xf]
    %v106 = vld [vmem:[#allocation5 + $0xd8] sm:$0xf]
    %v107 = vld [vmem:[#allocation5 + $0xdc] sm:$0xf]
    %v108 = vld [vmem:[#allocation5 + $0xe0] sm:$0xf]
    %v109 = vld [vmem:[#allocation5 + $0xe4] sm:$0xf]
    %v110 = vld [vmem:[#allocation5 + $0xe8] sm:$0xf]
    %v111 = vld [vmem:[#allocation5 + $0xec] sm:$0xf]
    %v112 = vld [vmem:[#allocation5 + $0xf0] sm:$0xf]
    %v113 = vld [vmem:[#allocation5 + $0xf4] sm:$0xf]
    %v114 = vld [vmem:[#allocation5 + $0xf8] sm:$0xf]
    %v115 = vld [vmem:[#allocation5 + $0xfc] sm:$0xf]
    %v116 = vld [vmem:[%s2] sm:$0x1]
    %v118 = vlaneseq
    %v119 = vshrl.u32 %v118, 7
    %v120 = vsub.s32 0, %v119
    %v121 = vrot.slane %v116, %v120
    %v131 = vunpack.c.l.b16 %v44
    %v132 = vunpack.c.h.b16 %v44
    %v133 = vunpack.c.l.b16 %v45
    %v134 = vunpack.c.h.b16 %v45
    %v135 = vunpack.c.l.b16 %v46
    %v136 = vunpack.c.h.b16 %v46
    %v137 = vunpack.c.l.b16 %v47
    %v138 = vunpack.c.h.b16 %v47
    %v139 = vunpack.c.l.b16 %v48
    %v140 = vunpack.c.h.b16 %v48
    %v141 = vunpack.c.l.b16 %v49
    %v142 = vunpack.c.h.b16 %v49
    %v143 = vunpack.c.l.b16 %v50
    %v144 = vunpack.c.h.b16 %v50
    %v145 = vunpack.c.l.b16 %v51
    %v146 = vunpack.c.h.b16 %v51
    %v147 = vpack.c.b16 %v135, %v131
    %v148 = vpack.c.b16 %v136, %v132
    %v149 = vpack.c.b16 %v137, %v133
    %v150 = vpack.c.b16 %v138, %v134
    %v151 = vpack.c.b16 %v143, %v139
    %v152 = vpack.c.b16 %v144, %v140
    %v153 = vpack.c.b16 %v145, %v141
    %v154 = vpack.c.b16 %v146, %v142
    %v227 = vunpack.c.l.b16 %v52
    %v228 = vunpack.c.l.b16 %v53
    %v229 = vunpack.c.l.b16 %v54
    %v230 = vunpack.c.l.b16 %v55
    %v231 = vunpack.c.l.b16 %v56
    %v232 = vunpack.c.l.b16 %v57
    %v233 = vunpack.c.l.b16 %v58
    %v234 = vunpack.c.l.b16 %v59
    %v235 = vunpack.c.l.b16 %v60
    %v236 = vunpack.c.l.b16 %v61
    %v237 = vunpack.c.l.b16 %v62
    %v238 = vunpack.c.l.b16 %v63
    %v239 = vunpack.c.l.b16 %v64
    %v240 = vunpack.c.l.b16 %v65
    %v241 = vunpack.c.l.b16 %v66
    %v242 = vunpack.c.l.b16 %v67
    %v243 = vunpack.c.l.b16 %v68
    %v244 = vunpack.c.l.b16 %v69
    %v245 = vunpack.c.l.b16 %v70
    %v246 = vunpack.c.l.b16 %v71
    %v247 = vunpack.c.l.b16 %v72
    %v248 = vunpack.c.l.b16 %v73
    %v249 = vunpack.c.l.b16 %v74
    %v250 = vunpack.c.l.b16 %v75
    %v251 = vunpack.c.l.b16 %v76
    %v252 = vunpack.c.l.b16 %v77
    %v253 = vunpack.c.l.b16 %v78
    %v254 = vunpack.c.l.b16 %v79
    %v255 = vunpack.c.l.b16 %v80
    %v256 = vunpack.c.l.b16 %v81
    %v257 = vunpack.c.l.b16 %v82
    %v258 = vunpack.c.l.b16 %v83
    %v259 = vunpack.c.l.b16 %v84
    %v260 = vunpack.c.l.b16 %v85
    %v261 = vunpack.c.l.b16 %v86
    %v262 = vunpack.c.l.b16 %v87
    %v263 = vunpack.c.l.b16 %v88
    %v264 = vunpack.c.l.b16 %v89
    %v265 = vunpack.c.l.b16 %v90
    %v266 = vunpack.c.l.b16 %v91
    %v267 = vunpack.c.l.b16 %v92
    %v268 = vunpack.c.l.b16 %v93
    %v269 = vunpack.c.l.b16 %v94
    %v270 = vunpack.c.l.b16 %v95
    %v271 = vunpack.c.l.b16 %v96
    %v272 = vunpack.c.l.b16 %v97
    %v273 = vunpack.c.l.b16 %v98
    %v274 = vunpack.c.l.b16 %v99
    %v275 = vunpack.c.l.b16 %v100
    %v276 = vunpack.c.l.b16 %v101
    %v277 = vunpack.c.l.b16 %v102
    %v278 = vunpack.c.l.b16 %v103
    %v279 = vunpack.c.l.b16 %v104
    %v280 = vunpack.c.l.b16 %v105
    %v281 = vunpack.c.l.b16 %v106
    %v282 = vunpack.c.l.b16 %v107
    %v283 = vunpack.c.l.b16 %v108
    %v284 = vunpack.c.l.b16 %v109
    %v285 = vunpack.c.l.b16 %v110
    %v286 = vunpack.c.l.b16 %v111
    %v287 = vunpack.c.l.b16 %v112
    %v288 = vunpack.c.l.b16 %v113
    %v289 = vunpack.c.l.b16 %v114
    %v290 = vunpack.c.l.b16 %v115
    %v291 = vpack.c.b16 %v228, %v227
    %v292 = vpack.c.b16 %v230, %v229
    %v293 = vpack.c.b16 %v232, %v231
    %v294 = vpack.c.b16 %v234, %v233
    %v295 = vpack.c.b16 %v236, %v235
    %v296 = vpack.c.b16 %v238, %v237
    %v297 = vpack.c.b16 %v240, %v239
    %v298 = vpack.c.b16 %v242, %v241
    %v299 = vpack.c.b16 %v244, %v243
    %v300 = vpack.c.b16 %v246, %v245
    %v301 = vpack.c.b16 %v248, %v247
    %v302 = vpack.c.b16 %v250, %v249
    %v303 = vpack.c.b16 %v252, %v251
    %v304 = vpack.c.b16 %v254, %v253
    %v305 = vpack.c.b16 %v256, %v255
    %v306 = vpack.c.b16 %v258, %v257
    %v307 = vpack.c.b16 %v260, %v259
    %v308 = vpack.c.b16 %v262, %v261
    %v309 = vpack.c.b16 %v264, %v263
    %v310 = vpack.c.b16 %v266, %v265
    %v311 = vpack.c.b16 %v268, %v267
    %v312 = vpack.c.b16 %v270, %v269
    %v313 = vpack.c.b16 %v272, %v271
    %v314 = vpack.c.b16 %v274, %v273
    %v315 = vpack.c.b16 %v276, %v275
    %v316 = vpack.c.b16 %v278, %v277
    %v317 = vpack.c.b16 %v280, %v279
    %v318 = vpack.c.b16 %v282, %v281
    %v319 = vpack.c.b16 %v284, %v283
    %v320 = vpack.c.b16 %v286, %v285
    %v321 = vpack.c.b16 %v288, %v287
    %v322 = vpack.c.b16 %v290, %v289
    %355 = vmatprep.subr.bf16.mxu0 0
    %356 = vmatpush1.bf16.msra.mxu0 %v298
    %357 = vmatprep.subr.bf16.mxu0 0
    %358 = vmatpush1.bf16.msra.mxu0 %v297
    %359 = vmatprep.subr.bf16.mxu0 0
    %360 = vmatpush1.bf16.msra.mxu0 %v296
    %361 = vmatprep.subr.bf16.mxu0 0
    %362 = vmatpush1.bf16.msra.mxu0 %v295
    %363 = vmatprep.subr.bf16.mxu0 0
    %364 = vmatpush1.bf16.msra.mxu0 %v294
    %365 = vmatprep.subr.bf16.mxu0 0
    %366 = vmatpush1.bf16.msra.mxu0 %v293
    %367 = vmatprep.subr.bf16.mxu0 0
    %368 = vmatpush1.bf16.msra.mxu0 %v292
    %369 = vmatprep.subr.bf16.mxu0 0
    %370 = vmatpush1.bf16.msra.mxu0 %v291
    %371 = vmatprep.subr.bf16.mxu0 0
    %372 = vmatpush2.bf16.msra.mxu0 %v306
    %373 = vmatprep.subr.bf16.mxu0 0
    %374 = vmatpush2.bf16.msra.mxu0 %v305
    %375 = vmatprep.subr.bf16.mxu0 0
    %376 = vmatpush2.bf16.msra.mxu0 %v304
    %377 = vmatprep.subr.bf16.mxu0 0
    %378 = vmatpush2.bf16.msra.mxu0 %v303
    %379 = vmatprep.subr.bf16.mxu0 0
    %380 = vmatpush2.bf16.msra.mxu0 %v302
    %381 = vmatprep.subr.bf16.mxu0 0
    %382 = vmatpush2.bf16.msra.mxu0 %v301
    %383 = vmatprep.subr.bf16.mxu0 0
    %384 = vmatpush2.bf16.msra.mxu0 %v300
    %385 = vmatprep.subr.bf16.mxu0 0
    %386 = vmatpush2.bf16.msra.mxu0 %v299
    %387 = vmatprep.mubr.bf16.mxu0 %v148
    %388 = vmatmul.mubr.bf16.gmra.mxu0 %v147
    %v389 = vpop.f32.mrf.mxu0
    %v390 = vadd.f32 %v121, %v389
    %v391 = vpop.f32.mrf.mxu0
    %v392 = vpop.f32.mrf.mxu0
    %v393 = vadd.f32 %v121, %v392
    %v394 = vpop.f32.mrf.mxu0
    %395 = vmatprep.mubr.bf16.mxu0 %v152
    %396 = vmatmul.mubr.bf16.gmra.mxu0 %v151
    %v397 = vpop.f32.mrf.mxu0
    %v398 = vadd.f32 %v121, %v397
    %v399 = vpop.f32.mrf.mxu0
    %v400 = vpop.f32.mrf.mxu0
    %v401 = vadd.f32 %v121, %v400
    %v402 = vpop.f32.mrf.mxu0
    %403 = vdwg.mxu0
    %404 = vmatprep.subr.bf16.mxu0 0
    %405 = vmatpush1.bf16.msra.mxu0 %v314
    %406 = vmatprep.subr.bf16.mxu0 0
    %407 = vmatpush1.bf16.msra.mxu0 %v313
    %408 = vmatprep.subr.bf16.mxu0 0
    %409 = vmatpush1.bf16.msra.mxu0 %v312
    %410 = vmatprep.subr.bf16.mxu0 0
    %411 = vmatpush1.bf16.msra.mxu0 %v311
    %412 = vmatprep.subr.bf16.mxu0 0
    %413 = vmatpush1.bf16.msra.mxu0 %v310
    %414 = vmatprep.subr.bf16.mxu0 0
    %415 = vmatpush1.bf16.msra.mxu0 %v309
    %416 = vmatprep.subr.bf16.mxu0 0
    %417 = vmatpush1.bf16.msra.mxu0 %v308
    %418 = vmatprep.subr.bf16.mxu0 0
    %419 = vmatpush1.bf16.msra.mxu0 %v307
    %420 = vmatprep.subr.bf16.mxu0 0
    %421 = vmatpush2.bf16.msra.mxu0 %v322
    %422 = vmatprep.subr.bf16.mxu0 0
    %423 = vmatpush2.bf16.msra.mxu0 %v321
    %424 = vmatprep.subr.bf16.mxu0 0
    %425 = vmatpush2.bf16.msra.mxu0 %v320
    %426 = vmatprep.subr.bf16.mxu0 0
    %427 = vmatpush2.bf16.msra.mxu0 %v319
    %428 = vmatprep.subr.bf16.mxu0 0
    %429 = vmatpush2.bf16.msra.mxu0 %v318
    %430 = vmatprep.subr.bf16.mxu0 0
    %431 = vmatpush2.bf16.msra.mxu0 %v317
    %432 = vmatprep.subr.bf16.mxu0 0
    %433 = vmatpush2.bf16.msra.mxu0 %v316
    %434 = vmatprep.subr.bf16.mxu0 0
    %435 = vmatpush2.bf16.msra.mxu0 %v315
    %436 = vmatprep.mubr.bf16.mxu0 %v150
    %437 = vmatmul.mubr.bf16.gmra.mxu0 %v149
    %v438 = vpop.f32.mrf.mxu0
    %v439 = vadd.f32 %v390, %v438
    %v440 = vpop.f32.mrf.mxu0
    %v441 = vpop.f32.mrf.mxu0
    %v442 = vadd.f32 %v393, %v441
    %v443 = vpop.f32.mrf.mxu0
    %444 = vmatprep.mubr.bf16.mxu0 %v154
    %445 = vmatmul.mubr.bf16.gmra.mxu0 %v153
    %v446 = vpop.f32.mrf.mxu0
    %v447 = vadd.f32 %v398, %v446
    %v448 = vpop.f32.mrf.mxu0
    %v449 = vpop.f32.mrf.mxu0
    %v450 = vadd.f32 %v401, %v449
    %v451 = vpop.f32.mrf.mxu0
    %452 = vdwg.mxu0
    %453 = vst [vmem:[#allocation7] sm:$0xff] %v439
    %454 = vst [vmem:[#allocation7 + $0x8] sm:$0xff] %v442
    %455 = vst [vmem:[#allocation7 + $0x10] sm:$0xff] %v447
    %456 = vst [vmem:[#allocation7 + $0x18] sm:$0xff] %v450
    // Predicated region
    $region22: #{tpu_custom_call.1} parent=1 // pred_check
      _
    $region23: #{tpu_custom_call.1} parent=1 // pred_check_branch
      %458 = sbr.rel (0) target = $region25
    $region24: #{tpu_custom_call.1} parent=1 // pred_region
      %s460 = ssub.s32 512, 512
      %461 = vsyncadd [#allocation4], %s460
      %s462 = sshll.u32 [#allocation7], 4
      %s463 = int_to_ptr.vmem [resolvable:$true] %s462
      %468 = dma.vmem_to_hbm [thread:$0]  %s463, 512, %s3, [#allocation4], 128, 128, 8
    $region25: #{tpu_custom_call.1} parent=1 // pred_fallthru
      _
    // Predicated region
    $region26: #{tpu_custom_call.1} parent=1 // pred_check
      _
    $region27: #{tpu_custom_call.1} parent=1 // pred_check_branch
      %470 = sbr.rel (0) target = $region29
    $region28: #{tpu_custom_call.1} parent=1 // pred_region
      %471 = dma.done [#allocation4], 512
    $region29: #{tpu_custom_call.1} parent=1 // pred_fallthru
      _
    %472 = vsyncpa [#allocation3], 1
    %473 = vsyncpa [#allocation6], 1
    %474 = vsyncpa [#allocation4], 1

</llo_original>
